<compile_context>
chip_gen: v5e
topology: v5e:2x2
jax: 0.10.0
libtpu: 0.0.40
codegen_flags: <defaults>
</compile_context>

<pallas_src>
import jax
import jax.numpy as jnp
from jax import lax
from jax.experimental import pallas as pl
from jax.experimental.pallas import tpu as pltpu


CMAX = 200  # static upper bound on count (== emb rows in the torch module)
CPAD = 256  # lane-padded count (next multiple of 128 -> unmasked stores)


# ---------------------------------------------------------------------------
# Kernel: R^T[d, m, c] = f[c] * (KPA[m,d] - KPB[m,d]) + KPB[m,d] + emb[c,d]
#         with f[c] = c * scale,  scale = 1/(count-1)   (runtime SMEM scalar)
# ---------------------------------------------------------------------------
def _interp_kernel(scale_ref, kpa_ref, kpb_ref, embt_ref, out_ref):
    # scale_ref : (1,)          f32  SMEM
    # kpa_ref   : (3, M, 1)     f32  VMEM   (coordinate axis leading)
    # kpb_ref   : (3, M, 1)     f32  VMEM
    # embt_ref  : (3, 1, CPAD)  f32  VMEM
    # out_ref   : (3, M, CPAD)  f32  VMEM   (R transposed, lane-dense stores)
    cpad = out_ref.shape[2]
    scale = scale_ref[0]
    f = lax.broadcasted_iota(jnp.int32, (1, 1, cpad), 2).astype(jnp.float32) * scale
    kpa = kpa_ref[...]
    kpb = kpb_ref[...]
    # single full-size multiply + two adds; all broadcasts are lane/sublane/batch
    out_ref[...] = (kpa - kpb) * f + kpb + embt_ref[...]


# ---------------------------------------------------------------------------
# One jitted device program: fused jnp for dist/count/scale + the Pallas call
# ---------------------------------------------------------------------------
@jax.jit
def _head_device(KPA, KPB, emb):
    kpa = KPA.reshape(-1, 3).astype(jnp.float32)          # (M, 3)
    kpb = KPB.reshape(-1, 3).astype(jnp.float32)          # (M, 3)
    m = kpa.shape[0]

    # dist / count / scale: tiny, XLA-fused (no custom call).
    d = kpa - kpb
    dist = jnp.mean(jnp.sqrt(0.001 + jnp.sum(d * d, axis=-1)))
    # == min(200, max(15, int(dist / 0.01)))  (trunc toward zero, dist > 0)
    count = jnp.clip((dist / 0.01).astype(jnp.int32), 15, CMAX)
    scale = 1.0 / (count.astype(jnp.float32) - 1.0)

    # Kernel-friendly lane-dense layouts (pure layout plumbing).
    kpa_t = kpa.T[:, :, None]                             # (3, M, 1)
    kpb_t = kpb.T[:, :, None]                             # (3, M, 1)
    emb_pad = jnp.pad(emb.astype(jnp.float32),
                      ((0, CPAD - CMAX), (0, 0)))         # (CPAD, 3)
    embt = emb_pad.T[:, None, :]                          # (3, 1, CPAD)

    r_t = pl.pallas_call(
        _interp_kernel,
        out_shape=jax.ShapeDtypeStruct((3, m, CPAD), jnp.float32),
        in_specs=[
            pl.BlockSpec(memory_space=pltpu.MemorySpace.SMEM),   # scale
            pl.BlockSpec(memory_space=pltpu.MemorySpace.VMEM),   # kpa_t
            pl.BlockSpec(memory_space=pltpu.MemorySpace.VMEM),   # kpb_t
            pl.BlockSpec(memory_space=pltpu.MemorySpace.VMEM),   # embt
        ],
        out_specs=pl.BlockSpec(memory_space=pltpu.MemorySpace.VMEM),
    )(scale.reshape(1), kpa_t, kpb_t, embt)

    r_full = jnp.transpose(r_t, (1, 2, 0))                # (M, CPAD, 3)
    return r_full, count


# ---------------------------------------------------------------------------
# Wrapper reproducing Head.forward
# ---------------------------------------------------------------------------
def head_forward(KPA, KPB, emb):
    r_full, count_dev = _head_device(KPA, KPB, emb)
    # Data-dependent output shape -> one host sync of a single int32
    # (mirrors torch's `.item()`); the kernel itself never re-traces.
    count = int(jax.device_get(count_dev))
    R = r_full[:, :count, :]                              # tiny slice
    return R, emb


if __name__ == "__main__":
    key = jax.random.PRNGKey(0)
    k1, k2, k3 = jax.random.split(key, 3)

    B, N = 2, 8                                           # batch=2, keypoints=8
    KPA = jax.random.normal(k1, (B, N, 3), dtype=jnp.float32) * 0.5
    KPB = jax.random.normal(k2, (B, N, 3), dtype=jnp.float32) * 0.5
    # nn.Parameter(torch.randn((200, 3)) * 0.002) -- deterministic synthetic init
    emb = jax.random.normal(k3, (CMAX, 3), dtype=jnp.float32) * 0.002

    R, emb_out = head_forward(KPA, KPB, emb)
    R = jax.block_until_ready(R)

    count = R.shape[1]
    assert 15 <= count <= CMAX

    # Pure-JAX reference at the same count (mirrors the torch forward).
    f = jnp.linspace(0.0, 1.0, count)[None, :, None]
    K = KPA[..., None, :] * f + KPB[..., None, :] * (1.0 - f)
    R_ref = (emb[:count, :][None, :, :] + K).reshape(-1, count, 3)

    assert R.shape == (B * N, count, 3)
    assert emb_out.shape == (CMAX, 3)
    assert jnp.allclose(R, R_ref, atol=1e-5, rtol=1e-5)

    print("KERNEL_OK")
</pallas_src>

<mosaic_0001>
module attributes {stable_mosaic.version = 11 : i64} {
  func.func @_interp_kernel(%arg0: memref<1xf32, #tpu.memory_space<smem>>, %arg1: memref<3x16x1xf32, #tpu.memory_space<vmem>>, %arg2: memref<3x16x1xf32, #tpu.memory_space<vmem>>, %arg3: memref<3x1x256xf32, #tpu.memory_space<vmem>>, %arg4: memref<3x16x256xf32, #tpu.memory_space<vmem>>) attributes {dimension_semantics = [], scalar_prefetch = 0 : i64, scratch_operands = 0 : i64, tpu.core_type = #tpu.core_type<tc>} {
    %c0 = arith.constant 0 : index
    %0 = memref.load %arg0[%c0] : memref<1xf32, #tpu.memory_space<smem>>
    %1 = tpu.iota {dimensions = array<i32: 2>} : vector<1x1x256xi32>
    %2 = arith.sitofp %1 : vector<1x1x256xi32> to vector<1x1x256xf32>
    %3 = vector.broadcast %0 : f32 to vector<1x1x256xf32>
    %4 = arith.mulf %2, %3 : vector<1x1x256xf32>
    %c0_0 = arith.constant 0 : index
    %c0_1 = arith.constant 0 : index
    %c0_2 = arith.constant 0 : index
    %5 = vector.load %arg1[%c0_0, %c0_1, %c0_2] : memref<3x16x1xf32, #tpu.memory_space<vmem>>, vector<3x16x1xf32>
    %c0_3 = arith.constant 0 : index
    %c0_4 = arith.constant 0 : index
    %c0_5 = arith.constant 0 : index
    %6 = vector.load %arg2[%c0_3, %c0_4, %c0_5] : memref<3x16x1xf32, #tpu.memory_space<vmem>>, vector<3x16x1xf32>
    %7 = arith.subf %5, %6 : vector<3x16x1xf32>
    %8 = vector.broadcast %7 : vector<3x16x1xf32> to vector<3x16x256xf32>
    %9 = vector.broadcast %4 : vector<1x1x256xf32> to vector<3x16x256xf32>
    %10 = arith.mulf %8, %9 : vector<3x16x256xf32>
    %11 = vector.broadcast %6 : vector<3x16x1xf32> to vector<3x16x256xf32>
    %12 = arith.addf %10, %11 : vector<3x16x256xf32>
    %c0_6 = arith.constant 0 : index
    %c0_7 = arith.constant 0 : index
    %c0_8 = arith.constant 0 : index
    %13 = vector.load %arg3[%c0_6, %c0_7, %c0_8] : memref<3x1x256xf32, #tpu.memory_space<vmem>>, vector<3x1x256xf32>
    %14 = vector.broadcast %13 : vector<3x1x256xf32> to vector<3x16x256xf32>
    %15 = arith.addf %12, %14 : vector<3x16x256xf32>
    %c0_9 = arith.constant 0 : index
    %c0_10 = arith.constant 0 : index
    %c0_11 = arith.constant 0 : index
    %16 = vector.load %arg4[%c0_9, %c0_10, %c0_11] : memref<3x16x256xf32, #tpu.memory_space<vmem>>, vector<3x16x256xf32>
    tpu.vector_store %arg4[%c0_9, %c0_10, %c0_11], %15 {strides = array<i32>} : memref<3x16x256xf32, #tpu.memory_space<vmem>>, vector<3x16x256xf32>,
    return
  }
}

</mosaic_0001>

<llo_original>
// kernel: _head_device.1
$region0: #{_head_device.1}
  #allocation0 [shape = 'u32[]', space=smem, size = 0x4, offset = 0x4, fixed_abs, tag = 'smem constant byte address 0x4 - core index']
  #allocation1 [shape = 'u32[72,128]{1,0:T(1,128)}', space=vmem, size = 0x9000, scoped, tag = 'internal scratch']
  #allocation2 [shape = 'f32[1]{0:T(128)S(6)}', space=smem, size = 0x200, scoped, tag = 'scoped memory for _head_device.1']
  %s0 = inlined_call_operand.<no memory space> [shape: f32[1], index: 0, kind: input, shape index: {}]
  %s1 = inlined_call_operand.vmem [shape: f32[3,16,1], index: 1, kind: input, shape index: {}]
  %s2 = inlined_call_operand.vmem [shape: f32[3,16,1], index: 2, kind: input, shape index: {}]
  %s3 = inlined_call_operand.vmem [shape: f32[3,1,256], index: 3, kind: input, shape index: {}]
  %s4 = inlined_call_operand.hbm [shape: f32[3,16,256], index: 4, kind: output, shape index: {}]
  %s5 = sld [smem:[#allocation0]]
  $region26: #{_head_device.1} parent=0
    _
  %s7 = ssub.s32 1, %s5
  %s8 = scalar_select 0, %s7, %s5
  %9 = sst [smem:[#allocation2]] %s0
  $region1: #{_head_device.1} parent=0
    #allocation3 [shape = 'u8[49152]{0}', space=vmem, size = 0xc000, scoped, tag = 'output window, operand 0, single buffered']
    #allocation4 [shape = 's32[1]{0}', space=sflag, size = 0x4, scoped, tag = 'scoped memory for _head_device.1']
    %10 = vsyncpa [#allocation4], 0
    // Predicated region
    $region2: #{_head_device.1} parent=1 // pred_check
      _
    $region3: #{_head_device.1} parent=1 // pred_check_branch
      %12 = sbr.rel (0) target = $region5
    $region4: #{_head_device.1} parent=1 // pred_region
      _
    $region5: #{_head_device.1} parent=1 // pred_fallthru
      _
    // Predicated region
    $region6: #{_head_device.1} parent=1 // pred_check
      _
    $region7: #{_head_device.1} parent=1 // pred_check_branch
      %14 = sbr.rel (0) target = $region9
    $region8: #{_head_device.1} parent=1 // pred_region
      _
    $region9: #{_head_device.1} parent=1 // pred_fallthru
      _
    // Predicated region
    $region10: #{_head_device.1} parent=1 // pred_check
      _
    $region11: #{_head_device.1} parent=1 // pred_check_branch
      %16 = sbr.rel (0) target = $region13
    $region12: #{_head_device.1} parent=1 // pred_region
      _
    $region13: #{_head_device.1} parent=1 // pred_fallthru
      _
    // Predicated region
    $region14: #{_head_device.1} parent=1 // pred_check
      _
    $region15: #{_head_device.1} parent=1 // pred_check_branch
      %18 = sbr.rel (0) target = $region17
    $region16: #{_head_device.1} parent=1 // pred_region
      _
    $region17: #{_head_device.1} parent=1 // pred_fallthru
      _
    %s19 = sld [smem:[#allocation2]]
    %v20 = vlaneseq
    %v21 = vand.u32 %v20, 127
    %v22 = vadd.s32 %v21, 128
    %v23 = vcvt.s32.f32 %v21
    %v24 = vcvt.s32.f32 %v22
    %v25 = vstv %s19
    %v26 = vmul.f32 %v23, %v25
    %v27 = vmul.f32 %v24, %v25
    %v28 = vld [vmem:[%s1] sm:$0xff]
    %v29 = vld [vmem:[%s1 + $0x8] sm:$0xff]
    %v30 = vld [vmem:[%s1 + $0x10] sm:$0xff]
    %v31 = vld [vmem:[%s1 + $0x18] sm:$0xff]
    %v32 = vld [vmem:[%s1 + $0x20] sm:$0xff]
    %v33 = vld [vmem:[%s1 + $0x28] sm:$0xff]
    %v34 = vld [vmem:[%s2] sm:$0xff]
    %v35 = vld [vmem:[%s2 + $0x8] sm:$0xff]
    %v36 = vld [vmem:[%s2 + $0x10] sm:$0xff]
    %v37 = vld [vmem:[%s2 + $0x18] sm:$0xff]
    %v38 = vld [vmem:[%s2 + $0x20] sm:$0xff]
    %v39 = vld [vmem:[%s2 + $0x28] sm:$0xff]
    %v40 = vsub.f32 %v28, %v34
    %v41 = vsub.f32 %v29, %v35
    %v42 = vsub.f32 %v30, %v36
    %v43 = vsub.f32 %v31, %v37
    %v44 = vsub.f32 %v32, %v38
    %v45 = vsub.f32 %v33, %v39
    %47 = vset.pattern.permute.xlu0 0
    %48 = vperm.xlu0 %47, %v40
    %v49 = vpop.permute.xlu0 %48
    %52 = vset.pattern.permute.xlu0 0
    %53 = vperm.xlu0 %52, %v41
    %v54 = vpop.permute.xlu0 %53
    %57 = vset.pattern.permute.xlu0 0
    %58 = vperm.xlu0 %57, %v42
    %v59 = vpop.permute.xlu0 %58
    %62 = vset.pattern.permute.xlu0 0
    %63 = vperm.xlu0 %62, %v43
    %v64 = vpop.permute.xlu0 %63
    %67 = vset.pattern.permute.xlu0 0
    %68 = vperm.xlu0 %67, %v44
    %v69 = vpop.permute.xlu0 %68
    %72 = vset.pattern.permute.xlu0 0
    %73 = vperm.xlu0 %72, %v45
    %v74 = vpop.permute.xlu0 %73
    %v76 = vmul.f32 %v49, %v26
    %v77 = vmul.f32 %v49, %v27
    %v78 = vmul.f32 %v54, %v26
    %v79 = vmul.f32 %v54, %v27
    %v80 = vmul.f32 %v59, %v26
    %v81 = vmul.f32 %v59, %v27
    %v82 = vmul.f32 %v64, %v26
    %v83 = vmul.f32 %v64, %v27
    %v84 = vmul.f32 %v69, %v26
    %v85 = vmul.f32 %v69, %v27
    %v86 = vmul.f32 %v74, %v26
    %v87 = vmul.f32 %v74, %v27
    %89 = vset.pattern.permute.xlu0 0
    %90 = vperm.xlu0 %89, %v34
    %v91 = vpop.permute.xlu0 %90
    %94 = vset.pattern.permute.xlu0 0
    %95 = vperm.xlu0 %94, %v35
    %v96 = vpop.permute.xlu0 %95
    %99 = vset.pattern.permute.xlu0 0
    %100 = vperm.xlu0 %99, %v36
    %v101 = vpop.permute.xlu0 %100
    %104 = vset.pattern.permute.xlu0 0
    %105 = vperm.xlu0 %104, %v37
    %v106 = vpop.permute.xlu0 %105
    %109 = vset.pattern.permute.xlu0 0
    %110 = vperm.xlu0 %109, %v38
    %v111 = vpop.permute.xlu0 %110
    %114 = vset.pattern.permute.xlu0 0
    %115 = vperm.xlu0 %114, %v39
    %v116 = vpop.permute.xlu0 %115
    %v118 = vadd.f32 %v76, %v91
    %v119 = vadd.f32 %v77, %v91
    %v120 = vadd.f32 %v78, %v96
    %v121 = vadd.f32 %v79, %v96
    %v122 = vadd.f32 %v80, %v101
    %v123 = vadd.f32 %v81, %v101
    %v124 = vadd.f32 %v82, %v106
    %v125 = vadd.f32 %v83, %v106
    %v126 = vadd.f32 %v84, %v111
    %v127 = vadd.f32 %v85, %v111
    %v128 = vadd.f32 %v86, %v116
    %v129 = vadd.f32 %v87, %v116
    %v130 = vld [vmem:[%s3] sm:$0x3]
    %v131 = vld [vmem:[%s3 + $0x2] sm:$0x3]
    %v132 = vld [vmem:[%s3 + $0x4] sm:$0x3]
    %v136 = vperm.slane %v130, 0
    %v137 = vperm.slane %v130, 1
    %v138 = vperm.slane %v131, 0
    %v139 = vperm.slane %v131, 1
    %v140 = vperm.slane %v132, 0
    %v141 = vperm.slane %v132, 1
    %v148 = vadd.f32 %v118, %v136
    %v149 = vadd.f32 %v119, %v137
    %v150 = vadd.f32 %v120, %v136
    %v151 = vadd.f32 %v121, %v137
    %v152 = vadd.f32 %v122, %v138
    %v153 = vadd.f32 %v123, %v139
    %v154 = vadd.f32 %v124, %v138
    %v155 = vadd.f32 %v125, %v139
    %v156 = vadd.f32 %v126, %v140
    %v157 = vadd.f32 %v127, %v141
    %v158 = vadd.f32 %v128, %v140
    %v159 = vadd.f32 %v129, %v141
    %160 = vst [vmem:[#allocation3] sm:$0xff] %v148
    %161 = vst [vmem:[#allocation3 + $0x8] sm:$0xff] %v149
    %162 = vst [vmem:[#allocation3 + $0x10] sm:$0xff] %v150
    %163 = vst [vmem:[#allocation3 + $0x18] sm:$0xff] %v151
    %164 = vst [vmem:[#allocation3 + $0x20] sm:$0xff] %v152
    %165 = vst [vmem:[#allocation3 + $0x28] sm:$0xff] %v153
    %166 = vst [vmem:[#allocation3 + $0x30] sm:$0xff] %v154
    %167 = vst [vmem:[#allocation3 + $0x38] sm:$0xff] %v155
    %168 = vst [vmem:[#allocation3 + $0x40] sm:$0xff] %v156
    %169 = vst [vmem:[#allocation3 + $0x48] sm:$0xff] %v157
    %170 = vst [vmem:[#allocation3 + $0x50] sm:$0xff] %v158
    %171 = vst [vmem:[#allocation3 + $0x58] sm:$0xff] %v159
    // Predicated region
    $region18: #{_head_device.1} parent=1 // pred_check
      _
    $region19: #{_head_device.1} parent=1 // pred_check_branch
      %173 = sbr.rel (0) target = $region21
    $region20: #{_head_device.1} parent=1 // pred_region
      %175 = vsyncadd [#allocation4], 0
      %s176 = sshll.u32 [#allocation3], 4
      %s177 = int_to_ptr.vmem [resolvable:$true] %s176
      %s178 = sshll.u32 %s4, 4
      %s179 = int_to_ptr.hbm [resolvable:$true] %s178
      %184 = dma.vmem_to_hbm [thread:$0]  %s177, 1536, %s179, [#allocation4], 256, 256, 16
    $region21: #{_head_device.1} parent=1 // pred_fallthru
      _
    // Predicated region
    $region22: #{_head_device.1} parent=1 // pred_check
      _
    $region23: #{_head_device.1} parent=1 // pred_check_branch
      %186 = sbr.rel (0) target = $region25
    $region24: #{_head_device.1} parent=1 // pred_region
      %188 = dma.done [#allocation4], 1536
    $region25: #{_head_device.1} parent=1 // pred_fallthru
      _
    %189 = vsyncpa [#allocation4], 1

</llo_original>
